<compile_context>
chip_gen: v5e
topology: v5e:2x2
jax: 0.10.0
libtpu: 0.0.40
codegen_flags: <defaults>
</compile_context>

<pallas_src>
import jax
import jax.numpy as jnp
import numpy as np
from jax.experimental import pallas as pl
from jax.experimental.pallas import tpu as pltpu


# ---------------------------------------------------------------------------
# Kernel
# ---------------------------------------------------------------------------
def _fusion_kernel(xl_ref, xh_ref, w1_ref, s1_ref, b1_ref, mupT_ref, out_ref):
    f32 = jnp.float32
    # 1x1 conv over channels at LOW resolution: (Coc,Cin) @ (Cin,HWin).
    y_low = jnp.dot(w1_ref[...], xl_ref[...], preferred_element_type=f32)
    # Folded BatchNorm (per-channel scale/bias, broadcast over lanes).
    # Applying it pre-upsample is exact: interpolation rows sum to 1.
    y_low = y_low * s1_ref[...] + b1_ref[...]
    # Bilinear x2 upsample as a single MXU matmul: (Coc,HWin) @ (HWin,T).
    y_hi = jnp.dot(y_low, mupT_ref[...], preferred_element_type=f32)
    # Residual add.  softmax over the 1-channel conv-stack output is
    # identically 1.0, so this IS the exact module output.
    out_ref[...] = (y_hi + xh_ref[...]).astype(out_ref.dtype)


# ---------------------------------------------------------------------------
# Host-side helpers
# ---------------------------------------------------------------------------
def _bilinear_up_matrix(n_in, n_out):
    """1-D bilinear interpolation matrix, align_corners=True. (n_out, n_in)."""
    if n_in == 1:
        return np.ones((n_out, 1), np.float32)
    src = np.arange(n_out, dtype=np.float64) * (n_in - 1) / (n_out - 1)
    i0 = np.clip(np.floor(src).astype(np.int64), 0, n_in - 2)
    frac = (src - i0).astype(np.float32)
    U = np.zeros((n_out, n_in), np.float32)
    rows = np.arange(n_out)
    U[rows, i0] += 1.0 - frac
    U[rows, i0 + 1] += frac
    return U


def _make_upsample_matrix_T(Hin, Win, H, W):
    """(Hin*Win, H*W) matrix M_up^T so that X_up = X(C,HWin) @ M_up^T."""
    m = np.kron(_bilinear_up_matrix(Hin, H), _bilinear_up_matrix(Win, W))
    return jnp.asarray(m.T)                                   # (HWin, HW)


def _pick_lane_tile(HW, N):
    """Lane-dense tile over H*W; >=2 grid steps at batch 1 (megacore/v7x)."""
    if HW % 128 != 0:
        return HW                    # full extent (valid BlockSpec exemption)
    t, max_t = HW, 4096
    while (t > max_t or (N == 1 and t == HW)) and t % 256 == 0:
        t //= 2
    return t


# ---------------------------------------------------------------------------
# Wrapper
# ---------------------------------------------------------------------------
def fusion_forward(x_l, x_h, params, eps=1e-5):
    """Exact forward of the `Fusion` module (inference-mode BatchNorm).

    x_l: (N, Cin, Hin, Win), x_h: (N, Coc, 2*Hin, 2*Win), NCHW float32.
    params: dict with the live-path parameters
        'conv1x1_w'                     (Coc, Cin)   from (Coc, Cin, 1, 1)
        'bn_gamma','bn_beta','bn_mean','bn_var'      (Coc,)
    Any other entries (SE attention + conv-stack, the dead branch) are ignored.
    """
    N, Cin, Hin, Win = x_l.shape
    _, Coc, H, W = x_h.shape
    HW, HWin = H * W, Hin * Win

    w1 = params["conv1x1_w"].reshape(Coc, Cin)
    s = params["bn_gamma"] / jnp.sqrt(params["bn_var"] + eps)
    b = params["bn_beta"] - params["bn_mean"] * s
    s1 = s.reshape(Coc, 1).astype(jnp.float32)     # broadcast over lanes (HW)
    b1 = b.reshape(Coc, 1).astype(jnp.float32)

    m_up_T = _make_upsample_matrix_T(Hin, Win, H, W)          # (HWin, HW)

    # NCHW is already (N, C, H*W) after a reshape -- no transposes needed.
    xl_flat = x_l.reshape(N, Cin, HWin).astype(jnp.float32)
    xh_flat = x_h.reshape(N, Coc, HW).astype(jnp.float32)

    T = _pick_lane_tile(HW, N)
    n_t = HW // T

    flops = N * (n_t * 2 * Coc * Cin * HWin + 2 * Coc * HWin * HW + 3 * Coc * HW)
    bytes_accessed = 4 * (xl_flat.size * n_t + xh_flat.size + N * Coc * HW
                          + m_up_T.size + w1.size + s1.size + b1.size)

    out_flat = pl.pallas_call(
        _fusion_kernel,
        out_shape=jax.ShapeDtypeStruct((N, Coc, HW), jnp.float32),
        grid_spec=pltpu.PrefetchScalarGridSpec(
            num_scalar_prefetch=0,
            grid=(N, n_t),
            in_specs=[
                pl.BlockSpec((None, Cin, HWin), lambda n, t: (n, 0, 0)),  # x_l
                pl.BlockSpec((None, Coc, T), lambda n, t: (n, 0, t)),     # x_h
                pl.BlockSpec((Coc, Cin), lambda n, t: (0, 0)),            # W1
                pl.BlockSpec((Coc, 1), lambda n, t: (0, 0)),              # BN scale
                pl.BlockSpec((Coc, 1), lambda n, t: (0, 0)),              # BN bias
                pl.BlockSpec((HWin, T), lambda n, t: (0, t)),             # M_up^T
            ],
            out_specs=pl.BlockSpec((None, Coc, T), lambda n, t: (n, 0, t)),
        ),
        compiler_params=pltpu.CompilerParams(
            dimension_semantics=("parallel", "parallel")),
        cost_estimate=pl.CostEstimate(flops=flops, transcendentals=0,
                                      bytes_accessed=bytes_accessed),
    )(xl_flat, xh_flat, w1, s1, b1, m_up_T)

    return out_flat.reshape(N, Coc, H, W)


# ---------------------------------------------------------------------------
# Demo / self-test
# ---------------------------------------------------------------------------
if __name__ == "__main__":
    in_channels, out_channels = 64, 32
    ratio = 16
    N, Hin, Win = 2, 8, 8
    H, W = 2 * Hin, 2 * Win
    C2 = 2 * out_channels
    Cr = C2 // ratio

    key = jax.random.PRNGKey(0)
    keys = jax.random.split(key, 16)

    def rnd(k, shape, scale=0.1):
        return scale * jax.random.normal(k, shape, dtype=jnp.float32)

    # Inputs (NCHW, matching the PyTorch module's forward signature)
    x_l = jax.random.normal(keys[0], (N, in_channels, Hin, Win), jnp.float32)
    x_h = jax.random.normal(keys[1], (N, out_channels, H, W), jnp.float32)

    # Live-path parameters: conv1x1 (bias=False) + BatchNorm2d.
    w1 = rnd(keys[2], (out_channels, in_channels))
    k1, k2, k3, k4 = jax.random.split(keys[3], 4)
    gamma = 1.0 + 0.1 * jax.random.normal(k1, (out_channels,), jnp.float32)
    beta = 0.1 * jax.random.normal(k2, (out_channels,), jnp.float32)
    mean = 0.1 * jax.random.normal(k3, (out_channels,), jnp.float32)
    var = 0.5 + jax.random.uniform(k4, (out_channels,), jnp.float32)

    params = {
        "conv1x1_w": w1,
        "bn_gamma": gamma, "bn_beta": beta, "bn_mean": mean, "bn_var": var,
        # Dead branch (SE attention + 1x1/3x3 conv stack).  Present only to
        # mirror the module's parameterization: softmax(dim=1) over the
        # 1-channel conv-stack output is identically 1.0, so these provably
        # cannot affect the forward output.
        "ca_compress_w": rnd(keys[4], (Cr, C2)), "ca_compress_b": rnd(keys[5], (Cr,)),
        "ca_excite_w": rnd(keys[6], (C2, Cr)), "ca_excite_b": rnd(keys[7], (C2,)),
        "conv_a_w": rnd(keys[8], (out_channels, C2)), "conv_a_b": rnd(keys[9], (out_channels,)),
        "conv_b_w": rnd(keys[10], (out_channels // 2, out_channels, 3, 3)),
        "conv_b_b": rnd(keys[11], (out_channels // 2,)),
        "conv_c_w": rnd(keys[12], (1, out_channels // 2, 3, 3)),
        "conv_c_b": rnd(keys[13], (1,)),
    }

    out = jax.block_until_ready(fusion_forward(x_l, x_h, params))
    assert out.shape == (N, out_channels, H, W)
    assert bool(jnp.all(jnp.isfinite(out)))

    # Reference, following the module's op order (upsample -> conv1x1 -> BN,
    # then +x_h; softmax over the size-1 channel dim is identically 1).
    m_up_T = _make_upsample_matrix_T(Hin, Win, H, W)
    s_ref = (gamma / jnp.sqrt(var + 1e-5)).reshape(-1, 1)
    b_ref = (beta - mean * (gamma / jnp.sqrt(var + 1e-5))).reshape(-1, 1)
    xl_flat = x_l.reshape(N, in_channels, Hin * Win)
    x_up = jnp.einsum("nci,ip->ncp", xl_flat, m_up_T)
    x_l1 = jnp.einsum("oc,ncp->nop", w1, x_up) * s_ref + b_ref
    expected = (x_l1 + x_h.reshape(N, out_channels, H * W)).reshape(
        N, out_channels, H, W)
    np.testing.assert_allclose(np.asarray(out), np.asarray(expected),
                               rtol=1e-3, atol=1e-3)

    print("KERNEL_OK")
</pallas_src>

<mosaic_0001>
module attributes {stable_mosaic.version = 11 : i64} {
  func.func @_fusion_kernel(%arg0: i32, %arg1: i32, %arg2: memref<1x64x64xf32, #tpu.memory_space<vmem>>, %arg3: memref<1x32x256xf32, #tpu.memory_space<vmem>>, %arg4: memref<32x64xf32, #tpu.memory_space<vmem>>, %arg5: memref<32x1xf32, #tpu.memory_space<vmem>>, %arg6: memref<32x1xf32, #tpu.memory_space<vmem>>, %arg7: memref<64x256xf32, #tpu.memory_space<vmem>>, %arg8: memref<1x32x256xf32, #tpu.memory_space<vmem>>) attributes {dimension_semantics = [#tpu.dimension_semantics<parallel>, #tpu.dimension_semantics<parallel>], iteration_bounds = array<i64: 2, 1>, scalar_prefetch = 0 : i64, scratch_operands = 0 : i64, tpu.core_type = #tpu.core_type<tc>, window_params = [{transform_indices = @transform_0, window_bounds = array<i64: 1, 64, 64>}, {transform_indices = @transform_1, window_bounds = array<i64: 1, 32, 256>}, {pipeline_mode = #tpu.pipeline_mode<synchronous>, transform_indices = @transform_2, window_bounds = array<i64: 32, 64>}, {pipeline_mode = #tpu.pipeline_mode<synchronous>, transform_indices = @transform_3, window_bounds = array<i64: 32, 1>}, {pipeline_mode = #tpu.pipeline_mode<synchronous>, transform_indices = @transform_4, window_bounds = array<i64: 32, 1>}, {transform_indices = @transform_5, window_bounds = array<i64: 64, 256>}, {transform_indices = @transform_6, window_bounds = array<i64: 1, 32, 256>}]} {
    %c0 = arith.constant 0 : index
    %c0_0 = arith.constant 0 : index
    %0 = vector.load %arg4[%c0, %c0_0] : memref<32x64xf32, #tpu.memory_space<vmem>>, vector<32x64xf32>
    %c0_1 = arith.constant 0 : index
    %c0_2 = arith.constant 0 : index
    %c0_3 = arith.constant 0 : index
    %1 = vector.load %arg2[%c0_1, %c0_2, %c0_3] : memref<1x64x64xf32, #tpu.memory_space<vmem>>, vector<1x64x64xf32>
    %2 = vector.shape_cast %1 : vector<1x64x64xf32> to vector<64x64xf32>
    %cst = arith.constant dense<0.000000e+00> : vector<32x64xf32>
    %3 = tpu.matmul %0, %2, %cst {dimension_numbers = #tpu.dot_dimension_numbers<[1], [0], [0], [1], [0, 0, 1, 1], [], []>} : vector<32x64xf32>, vector<64x64xf32>, vector<32x64xf32> -> vector<32x64xf32>
    %c0_4 = arith.constant 0 : index
    %c0_5 = arith.constant 0 : index
    %4 = vector.load %arg5[%c0_4, %c0_5] : memref<32x1xf32, #tpu.memory_space<vmem>>, vector<32x1xf32>
    %5 = vector.broadcast %4 : vector<32x1xf32> to vector<32x64xf32>
    %6 = arith.mulf %3, %5 : vector<32x64xf32>
    %c0_6 = arith.constant 0 : index
    %c0_7 = arith.constant 0 : index
    %7 = vector.load %arg6[%c0_6, %c0_7] : memref<32x1xf32, #tpu.memory_space<vmem>>, vector<32x1xf32>
    %8 = vector.broadcast %7 : vector<32x1xf32> to vector<32x64xf32>
    %9 = arith.addf %6, %8 : vector<32x64xf32>
    %c0_8 = arith.constant 0 : index
    %c0_9 = arith.constant 0 : index
    %10 = vector.load %arg7[%c0_8, %c0_9] : memref<64x256xf32, #tpu.memory_space<vmem>>, vector<64x256xf32>
    %cst_10 = arith.constant dense<0.000000e+00> : vector<32x256xf32>
    %11 = tpu.matmul %9, %10, %cst_10 {dimension_numbers = #tpu.dot_dimension_numbers<[1], [0], [0], [1], [0, 0, 1, 1], [], []>} : vector<32x64xf32>, vector<64x256xf32>, vector<32x256xf32> -> vector<32x256xf32>
    %c0_11 = arith.constant 0 : index
    %c0_12 = arith.constant 0 : index
    %c0_13 = arith.constant 0 : index
    %12 = vector.load %arg3[%c0_11, %c0_12, %c0_13] : memref<1x32x256xf32, #tpu.memory_space<vmem>>, vector<1x32x256xf32>
    %13 = vector.shape_cast %12 : vector<1x32x256xf32> to vector<32x256xf32>
    %14 = arith.addf %11, %13 : vector<32x256xf32>
    %c0_14 = arith.constant 0 : index
    %c0_15 = arith.constant 0 : index
    %c0_16 = arith.constant 0 : index
    %15 = vector.load %arg8[%c0_14, %c0_15, %c0_16] : memref<1x32x256xf32, #tpu.memory_space<vmem>>, vector<1x32x256xf32>
    %16 = vector.shape_cast %15 : vector<1x32x256xf32> to vector<32x256xf32>
    %17 = vector.shape_cast %14 : vector<32x256xf32> to vector<1x32x256xf32>
    tpu.vector_store %arg8[%c0_14, %c0_15, %c0_16], %17 {strides = array<i32>} : memref<1x32x256xf32, #tpu.memory_space<vmem>>, vector<1x32x256xf32>,
    return
  }
  func.func @transform_0(%arg0: i32, %arg1: i32) -> (i32, i32, i32) {
    %c0_i32 = arith.constant 0 : i32
    %c0_i32_0 = arith.constant 0 : i32
    %c0_i32_1 = arith.constant 0 : i32
    return %arg0, %c0_i32, %c0_i32_0 : i32, i32, i32
  }
  func.func @transform_1(%arg0: i32, %arg1: i32) -> (i32, i32, i32) {
    %c0_i32 = arith.constant 0 : i32
    %c0_i32_0 = arith.constant 0 : i32
    return %arg0, %c0_i32, %arg1 : i32, i32, i32
  }
  func.func @transform_2(%arg0: i32, %arg1: i32) -> (i32, i32) {
    %c0_i32 = arith.constant 0 : i32
    %c0_i32_0 = arith.constant 0 : i32
    %c0_i32_1 = arith.constant 0 : i32
    return %c0_i32, %c0_i32_0 : i32, i32
  }
  func.func @transform_3(%arg0: i32, %arg1: i32) -> (i32, i32) {
    %c0_i32 = arith.constant 0 : i32
    %c0_i32_0 = arith.constant 0 : i32
    %c0_i32_1 = arith.constant 0 : i32
    return %c0_i32, %c0_i32_0 : i32, i32
  }
  func.func @transform_4(%arg0: i32, %arg1: i32) -> (i32, i32) {
    %c0_i32 = arith.constant 0 : i32
    %c0_i32_0 = arith.constant 0 : i32
    %c0_i32_1 = arith.constant 0 : i32
    return %c0_i32, %c0_i32_0 : i32, i32
  }
  func.func @transform_5(%arg0: i32, %arg1: i32) -> (i32, i32) {
    %c0_i32 = arith.constant 0 : i32
    %c0_i32_0 = arith.constant 0 : i32
    return %c0_i32, %arg1 : i32, i32
  }
  func.func @transform_6(%arg0: i32, %arg1: i32) -> (i32, i32, i32) {
    %c0_i32 = arith.constant 0 : i32
    %c0_i32_0 = arith.constant 0 : i32
    return %arg0, %c0_i32, %arg1 : i32, i32, i32
  }
}

</mosaic_0001>

<llo_original>
// kernel: tpu_custom_call.1
$region0: #{tpu_custom_call.1}
  #allocation0 [shape = 'u32[]', space=smem, size = 0x4, offset = 0x4, fixed_abs, tag = 'smem constant byte address 0x4 - core index']
  #allocation1 [shape = 'u32[72,128]{1,0:T(1,128)}', space=vmem, size = 0x9000, scoped, tag = 'internal scratch']
  %s0 = inlined_call_operand.hbm [shape: f32[2,64,64], index: 0, kind: input, shape index: {}]
  %s1 = inlined_call_operand.hbm [shape: f32[2,32,256], index: 1, kind: input, shape index: {}]
  %s2 = inlined_call_operand.vmem [shape: f32[32,64], index: 2, kind: input, shape index: {}]
  %s3 = inlined_call_operand.vmem [shape: f32[32,1], index: 3, kind: input, shape index: {}]
  %s4 = inlined_call_operand.vmem [shape: f32[32,1], index: 4, kind: input, shape index: {}]
  %s5 = inlined_call_operand.hbm [shape: f32[64,256], index: 5, kind: input, shape index: {}]
  %s6 = inlined_call_operand.hbm [shape: f32[2,32,256], index: 6, kind: output, shape index: {}]
  %s7 = sld [smem:[#allocation0]]
  $region69: #{tpu_custom_call.1} parent=0
    _
  %s9 = ssub.s32 1, %s7
  %s10 = scalar_select 0, %s9, %s7
  $region1: #{tpu_custom_call.1} parent=0
    #allocation2 [shape = 'u8[65536]{0}', space=vmem, size = 0x10000, scoped, tag = 'input window, operand 0']
    #allocation3 [shape = 's32[2]{0}', space=sflag, size = 0x8, scoped, tag = 'scoped memory for tpu_custom_call.1']
    #allocation4 [shape = 's32[2]{0}', space=sflag, size = 0x8, scoped, tag = 'scoped memory for tpu_custom_call.1']
    #allocation5 [shape = 'u8[65536]{0}', space=vmem, size = 0x10000, scoped, tag = 'input window, operand 1']
    #allocation6 [shape = 's32[2]{0}', space=sflag, size = 0x8, scoped, tag = 'scoped memory for tpu_custom_call.1']
    #allocation7 [shape = 'u8[65536]{0}', space=vmem, size = 0x10000, scoped, tag = 'input window, operand 5, single buffered']
    #allocation8 [shape = 'u8[65536]{0}', space=vmem, size = 0x10000, scoped, tag = 'output window, operand 0']
    %11 = vsyncpa [#allocation3], 0
    %s12 = scalar_lea.sflag [#allocation3], 1
    %13 = vsyncpa %s12, 0
    %14 = vsyncpa [#allocation6], 0
    %s15 = scalar_lea.sflag [#allocation6], 1
    %16 = vsyncpa %s15, 0
    %17 = vsyncpa [#allocation4], 0
    %s18 = scalar_lea.sflag [#allocation4], 1
    %19 = vsyncpa %s18, 0
    loop: start=0, step=1, limit=4
    $region2: #{tpu_custom_call.1} parent=1 // loop_pre_header
      _
    $region3: #{tpu_custom_call.1} parent=1 // loop_header
      %s21 = sphi 0, %s25
      %p22 = scmp.ge.s32.totalorder %s21, 4
      %s28 = sphi 0, %s40
      %s29 = sphi 0, %s36
      %s30 = sphi 0, %s28
      %s31 = sphi 0, %s29
      %s32 = sphi 0, %s30
      %s33 = sphi 0, %s31
      %s43 = sphi 0, %s45
      %s46 = sphi 0, %s43
      %s47 = sphi 0, %s46
      %s63 = sphi 0, %s47
      %s71 = sphi 0, %s73
      %s74 = sphi 0, %s71
      %s75 = sphi 0, %s74
      %s91 = sphi 0, %s75
      %s95 = sphi 0, %s95
      %s97 = sphi 0, %s95
      %s98 = sphi 0, %s97
      %s112 = sphi 0, %s98
      %s116 = sphi 0, %s116
      %s118 = sphi 0, %s116
      %s119 = sphi 0, %s118
      %s133 = sphi 0, %s119
      %s137 = sphi 0, %s137
      %s139 = sphi 0, %s137
      %s140 = sphi 0, %s139
      %s154 = sphi 0, %s140
      %s160 = sphi 0, %s162
      %s163 = sphi 0, %s160
      %s164 = sphi 0, %s163
      %s180 = sphi 0, %s164
      %s188 = sphi 0, %s190
      %s191 = sphi 0, %s188
      %s192 = sphi 0, %s191
      %s208 = sphi 0, %s192
    $region4: #{tpu_custom_call.1} parent=1 // loop_header_branch
      %24 = sbr.rel (%p22) target = $region8
    $region5: #{tpu_custom_call.1} parent=1 // loop_body
      %s26 = ssub.s32 %s21, 1
      %s27 = ssub.s32 %s21, 2
      %s34 = sadd.s32 1, %s29
      %p35 = scmp.ge.s32.totalorder %s34, 1
      %s36 = scalar_select %p35, 0, %s34
      %s37 = sadd.s32 1, %s28
      %s38 = scalar_select %p35, %s37, %s28
      %p39 = scmp.ge.s32.totalorder %s38, 2
      %s40 = scalar_select %p39, 0, %s38
      %s41 = ssub.s32 %s28, %s40
      %p42 = scmp.eq.s32.totalorder %s41, 0
      %s44 = sadd.s32 %s43, 1
      %s45 = scalar_select %p42, %s43, %s44
      %p48 = pneg %p42
      %p49 = scmp.eq.s32.totalorder %s21, 1
      %p50 = por %p48, %p49
      %p51 = scmp.ne.s32.totalorder %s43, %s46
      %p52 = scmp.eq.s32.totalorder %s21, 0
      %p53 = por %p51, %p52
      %p54 = scmp.ne.s32.totalorder %s43, %s46
      %p55 = scmp.eq.s32.totalorder %s26, 1
      %p56 = por %p54, %p55
      %p57 = scmp.ne.s32.totalorder %s46, %s47
      %p58 = scmp.eq.s32.totalorder %s26, 0
      %p59 = por %p57, %p58
      %p60 = scmp.ne.s32.totalorder %s46, %s47
      %p61 = scmp.eq.s32.totalorder %s27, 1
      %p62 = por %p60, %p61
      %p64 = scmp.ne.s32.totalorder %s47, %s63
      %p65 = scmp.eq.s32.totalorder %s27, 0
      %p66 = por %p64, %p65
      %s67 = ssub.s32 %s28, %s40
      %s68 = ssub.s32 %s29, %s36
      %s69 = sor.u32 %s67, %s68
      %p70 = scmp.eq.s32.totalorder %s69, 0
      %s72 = sadd.s32 %s71, 1
      %s73 = scalar_select %p70, %s71, %s72
      %p76 = pneg %p70
      %p77 = scmp.eq.s32.totalorder %s21, 1
      %p78 = por %p76, %p77
      %p79 = scmp.ne.s32.totalorder %s71, %s74
      %p80 = scmp.eq.s32.totalorder %s21, 0
      %p81 = por %p79, %p80
      %p82 = scmp.ne.s32.totalorder %s71, %s74
      %p83 = scmp.eq.s32.totalorder %s26, 1
      %p84 = por %p82, %p83
      %p85 = scmp.ne.s32.totalorder %s74, %s75
      %p86 = scmp.eq.s32.totalorder %s26, 0
      %p87 = por %p85, %p86
      %p88 = scmp.ne.s32.totalorder %s74, %s75
      %p89 = scmp.eq.s32.totalorder %s27, 1
      %p90 = por %p88, %p89
      %p92 = scmp.ne.s32.totalorder %s75, %s91
      %p93 = scmp.eq.s32.totalorder %s27, 0
      %p94 = por %p92, %p93
      %s96 = sadd.s32 %s95, 1
      %p99 = scmp.eq.s32.totalorder %s21, 1
      %p100 = scmp.ne.s32.totalorder %s95, %s97
      %p101 = scmp.eq.s32.totalorder %s21, 0
      %p102 = por %p100, %p101
      %p103 = scmp.ne.s32.totalorder %s95, %s97
      %p104 = scmp.eq.s32.totalorder %s26, 1
      %p105 = por %p103, %p104
      %p106 = scmp.ne.s32.totalorder %s97, %s98
      %p107 = scmp.eq.s32.totalorder %s26, 0
      %p108 = por %p106, %p107
      %p109 = scmp.ne.s32.totalorder %s97, %s98
      %p110 = scmp.eq.s32.totalorder %s27, 1
      %p111 = por %p109, %p110
      %p113 = scmp.ne.s32.totalorder %s98, %s112
      %p114 = scmp.eq.s32.totalorder %s27, 0
      %p115 = por %p113, %p114
      %s117 = sadd.s32 %s116, 1
      %p120 = scmp.eq.s32.totalorder %s21, 1
      %p121 = scmp.ne.s32.totalorder %s116, %s118
      %p122 = scmp.eq.s32.totalorder %s21, 0
      %p123 = por %p121, %p122
      %p124 = scmp.ne.s32.totalorder %s116, %s118
      %p125 = scmp.eq.s32.totalorder %s26, 1
      %p126 = por %p124, %p125
      %p127 = scmp.ne.s32.totalorder %s118, %s119
      %p128 = scmp.eq.s32.totalorder %s26, 0
      %p129 = por %p127, %p128
      %p130 = scmp.ne.s32.totalorder %s118, %s119
      %p131 = scmp.eq.s32.totalorder %s27, 1
      %p132 = por %p130, %p131
      %p134 = scmp.ne.s32.totalorder %s119, %s133
      %p135 = scmp.eq.s32.totalorder %s27, 0
      %p136 = por %p134, %p135
      %s138 = sadd.s32 %s137, 1
      %p141 = scmp.eq.s32.totalorder %s21, 1
      %p142 = scmp.ne.s32.totalorder %s137, %s139
      %p143 = scmp.eq.s32.totalorder %s21, 0
      %p144 = por %p142, %p143
      %p145 = scmp.ne.s32.totalorder %s137, %s139
      %p146 = scmp.eq.s32.totalorder %s26, 1
      %p147 = por %p145, %p146
      %p148 = scmp.ne.s32.totalorder %s139, %s140
      %p149 = scmp.eq.s32.totalorder %s26, 0
      %p150 = por %p148, %p149
      %p151 = scmp.ne.s32.totalorder %s139, %s140
      %p152 = scmp.eq.s32.totalorder %s27, 1
      %p153 = por %p151, %p152
      %p155 = scmp.ne.s32.totalorder %s140, %s154
      %p156 = scmp.eq.s32.totalorder %s27, 0
      %p157 = por %p155, %p156
      %s158 = ssub.s32 %s29, %s36
      %p159 = scmp.eq.s32.totalorder %s158, 0
      %s161 = sadd.s32 %s160, 1
      %s162 = scalar_select %p159, %s160, %s161
      %p165 = pneg %p159
      %p166 = scmp.eq.s32.totalorder %s21, 1
      %p167 = por %p165, %p166
      %p168 = scmp.ne.s32.totalorder %s160, %s163
      %p169 = scmp.eq.s32.totalorder %s21, 0
      %p170 = por %p168, %p169
      %p171 = scmp.ne.s32.totalorder %s160, %s163
      %p172 = scmp.eq.s32.totalorder %s26, 1
      %p173 = por %p171, %p172
      %p174 = scmp.ne.s32.totalorder %s163, %s164
      %p175 = scmp.eq.s32.totalorder %s26, 0
      %p176 = por %p174, %p175
      %p177 = scmp.ne.s32.totalorder %s163, %s164
      %p178 = scmp.eq.s32.totalorder %s27, 1
      %p179 = por %p177, %p178
      %p181 = scmp.ne.s32.totalorder %s164, %s180
      %p182 = scmp.eq.s32.totalorder %s27, 0
      %p183 = por %p181, %p182
      %s184 = ssub.s32 %s28, %s40
      %s185 = ssub.s32 %s29, %s36
      %s186 = sor.u32 %s184, %s185
      %p187 = scmp.eq.s32.totalorder %s186, 0
      %s189 = sadd.s32 %s188, 1
      %s190 = scalar_select %p187, %s188, %s189
      %p193 = pneg %p187
      %p194 = scmp.eq.s32.totalorder %s21, 1
      %p195 = por %p193, %p194
      %p196 = scmp.ne.s32.totalorder %s188, %s191
      %p197 = scmp.eq.s32.totalorder %s21, 0
      %p198 = por %p196, %p197
      %p199 = scmp.ne.s32.totalorder %s188, %s191
      %p200 = scmp.eq.s32.totalorder %s26, 1
      %p201 = por %p199, %p200
      %p202 = scmp.ne.s32.totalorder %s191, %s192
      %p203 = scmp.eq.s32.totalorder %s26, 0
      %p204 = por %p202, %p203
      %p205 = scmp.ne.s32.totalorder %s191, %s192
      %p206 = scmp.eq.s32.totalorder %s27, 1
      %p207 = por %p205, %p206
      %p209 = scmp.ne.s32.totalorder %s192, %s208
      %p210 = scmp.eq.s32.totalorder %s27, 0
      %p211 = por %p209, %p210
      %p212 = scmp.le.s32.totalorder 1, %s21
      %p213 = scmp.lt.s32.totalorder %s21, 3
      %p214 = pnand %p212, %p213
      %p215 = pneg %p214
      // Predicated region
      $region9: #{tpu_custom_call.1} parent=5 // pred_check
        _
      $region10: #{tpu_custom_call.1} parent=5 // pred_check_branch
        %217 = sbr.rel (%p214) target = $region12
      $region11: #{tpu_custom_call.1} parent=5 // pred_region
        %s218 = ssub.s32 %s21, 1
        // Predicated region
        $region13: #{tpu_custom_call.1} parent=11 // pred_check
          %p219 = pneg %p108
        $region14: #{tpu_custom_call.1} parent=11 // pred_check_branch
          %221 = sbr.rel (%p219) target = $region16
        $region15: #{tpu_custom_call.1} parent=11 // pred_region
          _
        $region16: #{tpu_custom_call.1} parent=11 // pred_fallthru
          _
        // Predicated region
        $region17: #{tpu_custom_call.1} parent=11 // pred_check
          %p222 = pneg %p129
        $region18: #{tpu_custom_call.1} parent=11 // pred_check_branch
          %224 = sbr.rel (%p222) target = $region20
        $region19: #{tpu_custom_call.1} parent=11 // pred_region
          _
        $region20: #{tpu_custom_call.1} parent=11 // pred_fallthru
          _
        // Predicated region
        $region21: #{tpu_custom_call.1} parent=11 // pred_check
          %p225 = pneg %p150
        $region22: #{tpu_custom_call.1} parent=11 // pred_check_branch
          %227 = sbr.rel (%p225) target = $region24
        $region23: #{tpu_custom_call.1} parent=11 // pred_region
          _
        $region24: #{tpu_custom_call.1} parent=11 // pred_fallthru
          _
        // Predicated region
        $region25: #{tpu_custom_call.1} parent=11 // pred_check
          %p228 = pneg %p176
        $region26: #{tpu_custom_call.1} parent=11 // pred_check_branch
          %230 = sbr.rel (%p228) target = $region28
        $region27: #{tpu_custom_call.1} parent=11 // pred_region
          %s231 = smul.u32 2, %s31
          %233 = vsyncadd [#allocation6], 0
          %s234 = smul.addr %s231, 8
          %s235 = scalar_lea.hbm %s5, %s234
          %s236 = sshll.u32 %s235, 4
          %s237 = int_to_ptr.hbm [resolvable:$true] %s236
          %s238 = sshll.u32 [#allocation7], 4
          %s239 = int_to_ptr.vmem [resolvable:$true] %s238
          %244 = dma.hbm_to_vmem [thread:$0]  %s237, 2048, %s239, [#allocation6], 256, 256, 16
        $region28: #{tpu_custom_call.1} parent=11 // pred_fallthru
          _
      $region12: #{tpu_custom_call.1} parent=5 // pred_fallthru
        _
      %p245 = scmp.lt.s32.totalorder %s21, 2
      // Predicated region
      $region29: #{tpu_custom_call.1} parent=5 // pred_check
        %p246 = pneg %p245
      $region30: #{tpu_custom_call.1} parent=5 // pred_check_branch
        %248 = sbr.rel (%p246) target = $region32
      $region31: #{tpu_custom_call.1} parent=5 // pred_region
        // Predicated region
        $region33: #{tpu_custom_call.1} parent=31 // pred_check
          %p249 = pneg %p53
        $region34: #{tpu_custom_call.1} parent=31 // pred_check_branch
          %251 = sbr.rel (%p249) target = $region36
        $region35: #{tpu_custom_call.1} parent=31 // pred_region
          %s252 = sand.u32 %s43, 1
          %s253 = scalar_lea.sflag [#allocation3], %s252
          %s254 = sand.u32 %s43, 1
          %s255 = smul.addr %s254, 64
          %s256 = scalar_lea.vmem [#allocation2], %s255
          %258 = vsyncadd %s253, 0
          %s259 = smul.addr %s28, 8
          %s260 = smul.addr %s259, 8
          %s261 = scalar_lea.hbm %s0, %s260
          %s262 = sshll.u32 %s261, 4
          %s263 = int_to_ptr.hbm [resolvable:$true] %s262
          %s264 = sshll.u32 %s256, 4
          %s265 = int_to_ptr.vmem [resolvable:$true] %s264
          %270 = dma.hbm_to_vmem [thread:$0]  %s263, 1024, %s265, %s253, 128, 128, 8
        $region36: #{tpu_custom_call.1} parent=31 // pred_fallthru
          _
        // Predicated region
        $region37: #{tpu_custom_call.1} parent=31 // pred_check
          %p271 = pneg %p81
        $region38: #{tpu_custom_call.1} parent=31 // pred_check_branch
          %273 = sbr.rel (%p271) target = $region40
        $region39: #{tpu_custom_call.1} parent=31 // pred_region
          %s274 = sand.u32 %s21, 1
          %s275 = scalar_lea.sflag [#allocation6], %s274
          %s276 = sand.u32 %s71, 1
          %s277 = smul.addr %s276, 64
          %s278 = scalar_lea.vmem [#allocation5], %s277
          %s279 = smul.u32 2, %s29
          %281 = vsyncadd %s275, 0
          %s282 = smul.addr %s28, 8
          %s283 = sadd.s32 %s279, %s282
          %s284 = smul.addr %s283, 8
          %s285 = scalar_lea.hbm %s1, %s284
          %s286 = sshll.u32 %s285, 4
          %s287 = int_to_ptr.hbm [resolvable:$true] %s286
          %s288 = sshll.u32 %s278, 4
          %s289 = int_to_ptr.vmem [resolvable:$true] %s288
          %294 = dma.hbm_to_vmem [thread:$0]  %s287, 1024, %s289, %s275, 256, 256, 16
        $region40: #{tpu_custom_call.1} parent=31 // pred_fallthru
          _
      $region32: #{tpu_custom_call.1} parent=5 // pred_fallthru
        _
      %p295 = scmp.le.s32.totalorder 1, %s21
      %p296 = scmp.lt.s32.totalorder %s21, 3
      %p297 = pnand %p295, %p296
      %p298 = pneg %p297
      // Predicated region
      $region41: #{tpu_custom_call.1} parent=5 // pred_check
        _
      $region42: #{tpu_custom_call.1} parent=5 // pred_check_branch
        %300 = sbr.rel (%p297) target = $region44
      $region43: #{tpu_custom_call.1} parent=5 // pred_region
        %s301 = ssub.s32 %s21, 1
        %s302 = sand.u32 %s46, 1
        %s303 = scalar_lea.sflag [#allocation3], %s302
        %s304 = sand.u32 %s46, 1
        %s305 = smul.addr %s304, 64
        %s306 = scalar_lea.vmem [#allocation2], %s305
        // Predicated region
        $region45: #{tpu_custom_call.1} parent=43 // pred_check
          %p307 = pneg %p59
        $region46: #{tpu_custom_call.1} parent=43 // pred_check_branch
          %309 = sbr.rel (%p307) target = $region48
        $region47: #{tpu_custom_call.1} parent=43 // pred_region
          %311 = dma.done %s303, 1024
        $region48: #{tpu_custom_call.1} parent=43 // pred_fallthru
          _
        %s312 = sand.u32 %s26, 1
        %s313 = scalar_lea.sflag [#allocation6], %s312
        %s314 = sand.u32 %s74, 1
        %s315 = smul.addr %s314, 64
        %s316 = scalar_lea.vmem [#allocation5], %s315
        // Predicated region
        $region49: #{tpu_custom_call.1} parent=43 // pred_check
          %p317 = pneg %p87
        $region50: #{tpu_custom_call.1} parent=43 // pred_check_branch
          %319 = sbr.rel (%p317) target = $region52
        $region51: #{tpu_custom_call.1} parent=43 // pred_region
          %321 = dma.done %s313, 1024
        $region52: #{tpu_custom_call.1} parent=43 // pred_fallthru
          _
        // Predicated region
        $region53: #{tpu_custom_call.1} parent=43 // pred_check
          %p322 = pneg %p176
        $region54: #{tpu_custom_call.1} parent=43 // pred_check_branch
          %324 = sbr.rel (%p322) target = $region56
        $region55: #{tpu_custom_call.1} parent=43 // pred_region
          %326 = dma.done [#allocation6], 2048
        $region56: #{tpu_custom_call.1} parent=43 // pred_fallthru
          _
        %s327 = sand.u32 %s46, 1
        %s328 = scalar_lea.sflag [#allocation3], %s327
        %s329 = sand.u32 %s46, 1
        %s330 = smul.addr %s329, 64
        %s331 = scalar_lea.vmem [#allocation2], %s330
        %p332 = pneg %p59
        %p333 = pneg %p56
        %s334 = sand.u32 %s26, 1
        %s335 = scalar_lea.sflag [#allocation6], %s334
        %s336 = sand.u32 %s74, 1
        %s337 = smul.addr %s336, 64
        %s338 = scalar_lea.vmem [#allocation5], %s337
        %p339 = pneg %p87
        %p340 = pneg %p84
        %p341 = pneg %p108
        %p342 = pneg %p105
        %p343 = pneg %p129
        %p344 = pneg %p126
        %p345 = pneg %p150
        %p346 = pneg %p147
        %p347 = pneg %p176
        %p348 = pneg %p173
        %p349 = pneg %p204
        %p350 = pneg %p201
        %s351 = sand.u32 %s191, 1
        %s352 = scalar_lea.sflag [#allocation4], %s351
        %s353 = sand.u32 %s191, 1
        %s354 = smul.addr %s353, 64
        %s355 = scalar_lea.vmem [#allocation8], %s354
        %s356 = smul.u32 2, %s31
        %s357 = smul.u32 2, %s31
        %s358 = smul.u32 2, %s31
        %v359 = vld [vmem:[%s2] sm:$0xff]
        %v360 = vld [vmem:[%s2 + $0x8] sm:$0xff]
        %v361 = vld [vmem:[%s2 + $0x10] sm:$0xff]
        %v362 = vld [vmem:[%s2 + $0x18] sm:$0xff]
        %v363 = vld [vmem:[%s306] sm:$0xff]
        %v364 = vld [vmem:[%s306 + $0x8] sm:$0xff]
        %v365 = vld [vmem:[%s306 + $0x10] sm:$0xff]
        %v366 = vld [vmem:[%s306 + $0x18] sm:$0xff]
        %v367 = vld [vmem:[%s306 + $0x20] sm:$0xff]
        %v368 = vld [vmem:[%s306 + $0x28] sm:$0xff]
        %v369 = vld [vmem:[%s306 + $0x30] sm:$0xff]
        %v370 = vld [vmem:[%s306 + $0x38] sm:$0xff]
        %vm371 = vcmask 523264
        %v373 = vsel %vm371, %v359, 0
        %v376 = vsel %vm371, %v360, 0
        %v379 = vsel %vm371, %v361, 0
        %v382 = vsel %vm371, %v362, 0
        %384 = vmatpush.msra.mxu0 0.0
        %385 = vmatpush.msra.mxu0 0.0
        %386 = vmatpush.msra.mxu0 0.0
        %387 = vmatpush.msra.mxu0 0.0
        %388 = vmatpush.msra.mxu0 0.0
        %389 = vmatpush.msra.mxu0 0.0
        %390 = vmatpush.msra.mxu0 0.0
        %391 = vmatpush.msra.mxu0 0.0
        %392 = vmatpush.msra.mxu0 %v370
        %393 = vmatpush.msra.mxu0 %v369
        %394 = vmatpush.msra.mxu0 %v368
        %395 = vmatpush.msra.mxu0 %v367
        %396 = vmatpush.msra.mxu0 %v366
        %397 = vmatpush.msra.mxu0 %v365
        %398 = vmatpush.msra.mxu0 %v364
        %399 = vmatpush.msra.mxu0 %v363
        %400 = vmatmul.f32.gmra.mxu0 %v373
        %v401 = vpop.f32.mrf.mxu0
        %v402 = vadd.f32 0.0, %v401
        %403 = vmatmul.f32.gmra.mxu0 %v376
        %v404 = vpop.f32.mrf.mxu0
        %v405 = vadd.f32 0.0, %v404
        %406 = vmatmul.f32.gmra.mxu0 %v379
        %v407 = vpop.f32.mrf.mxu0
        %v408 = vadd.f32 0.0, %v407
        %409 = vmatmul.f32.gmra.mxu0 %v382
        %v410 = vpop.f32.mrf.mxu0
        %v411 = vadd.f32 0.0, %v410
        %412 = vdwg.mxu0
        %v413 = vld [vmem:[%s3] sm:$0xff]
        %v414 = vld [vmem:[%s3 + $0x8] sm:$0xff]
        %v415 = vld [vmem:[%s3 + $0x10] sm:$0xff]
        %v416 = vld [vmem:[%s3 + $0x18] sm:$0xff]
        %418 = vset.pattern.permute.xlu0 0
        %419 = vperm.xlu0 %418, %v413
        %v420 = vpop.permute.xlu0 %419
        %423 = vset.pattern.permute.xlu0 0
        %424 = vperm.xlu0 %423, %v414
        %v425 = vpop.permute.xlu0 %424
        %428 = vset.pattern.permute.xlu0 0
        %429 = vperm.xlu0 %428, %v415
        %v430 = vpop.permute.xlu0 %429
        %433 = vset.pattern.permute.xlu0 0
        %434 = vperm.xlu0 %433, %v416
        %v435 = vpop.permute.xlu0 %434
        %v437 = vmul.f32 %v402, %v420
        %v438 = vmul.f32 %v405, %v425
        %v439 = vmul.f32 %v408, %v430
        %v440 = vmul.f32 %v411, %v435
        %v441 = vld [vmem:[%s4] sm:$0xff]
        %v442 = vld [vmem:[%s4 + $0x8] sm:$0xff]
        %v443 = vld [vmem:[%s4 + $0x10] sm:$0xff]
        %v444 = vld [vmem:[%s4 + $0x18] sm:$0xff]
        %446 = vset.pattern.permute.xlu0 0
        %447 = vperm.xlu0 %446, %v441
        %v448 = vpop.permute.xlu0 %447
        %451 = vset.pattern.permute.xlu0 0
        %452 = vperm.xlu0 %451, %v442
        %v453 = vpop.permute.xlu0 %452
        %456 = vset.pattern.permute.xlu0 0
        %457 = vperm.xlu0 %456, %v443
        %v458 = vpop.permute.xlu0 %457
        %461 = vset.pattern.permute.xlu0 0
        %462 = vperm.xlu0 %461, %v444
        %v463 = vpop.permute.xlu0 %462
        %v465 = vadd.f32 %v437, %v448
        %v466 = vadd.f32 %v438, %v453
        %v467 = vadd.f32 %v439, %v458
        %v468 = vadd.f32 %v440, %v463
        %v469 = vld [vmem:[#allocation7] sm:$0xff]
        %v470 = vld [vmem:[#allocation7 + $0x8] sm:$0xff]
        %v471 = vld [vmem:[#allocation7 + $0x10] sm:$0xff]
        %v472 = vld [vmem:[#allocation7 + $0x18] sm:$0xff]
        %v473 = vld [vmem:[#allocation7 + $0x20] sm:$0xff]
        %v474 = vld [vmem:[#allocation7 + $0x28] sm:$0xff]
        %v475 = vld [vmem:[#allocation7 + $0x30] sm:$0xff]
        %v476 = vld [vmem:[#allocation7 + $0x38] sm:$0xff]
        %v477 = vld [vmem:[#allocation7 + $0x40] sm:$0xff]
        %v478 = vld [vmem:[#allocation7 + $0x48] sm:$0xff]
        %v479 = vld [vmem:[#allocation7 + $0x50] sm:$0xff]
        %v480 = vld [vmem:[#allocation7 + $0x58] sm:$0xff]
        %v481 = vld [vmem:[#allocation7 + $0x60] sm:$0xff]
        %v482 = vld [vmem:[#allocation7 + $0x68] sm:$0xff]
        %v483 = vld [vmem:[#allocation7 + $0x70] sm:$0xff]
        %v484 = vld [vmem:[#allocation7 + $0x78] sm:$0xff]
        %v485 = vld [vmem:[%s316] sm:$0xff]
        %v486 = vld [vmem:[%s316 + $0x8] sm:$0xff]
        %v487 = vld [vmem:[%s316 + $0x10] sm:$0xff]
        %v488 = vld [vmem:[%s316 + $0x18] sm:$0xff]
        %v489 = vld [vmem:[%s316 + $0x20] sm:$0xff]
        %v490 = vld [vmem:[%s316 + $0x28] sm:$0xff]
        %v491 = vld [vmem:[%s316 + $0x30] sm:$0xff]
        %v492 = vld [vmem:[%s316 + $0x38] sm:$0xff]
        %v494 = vsel %vm371, %v465, 0
        %v497 = vsel %vm371, %v466, 0
        %v500 = vsel %vm371, %v467, 0
        %v503 = vsel %vm371, %v468, 0
        %505 = vmatpush.msra.mxu0 0.0
        %506 = vmatpush.msra.mxu0 0.0
        %507 = vmatpush.msra.mxu0 0.0
        %508 = vmatpush.msra.mxu0 0.0
        %509 = vmatpush.msra.mxu0 0.0
        %510 = vmatpush.msra.mxu0 0.0
        %511 = vmatpush.msra.mxu0 0.0
        %512 = vmatpush.msra.mxu0 0.0
        %513 = vmatpush.msra.mxu0 %v483
        %514 = vmatpush.msra.mxu0 %v481
        %515 = vmatpush.msra.mxu0 %v479
        %516 = vmatpush.msra.mxu0 %v477
        %517 = vmatpush.msra.mxu0 %v475
        %518 = vmatpush.msra.mxu0 %v473
        %519 = vmatpush.msra.mxu0 %v471
        %520 = vmatpush.msra.mxu0 %v469
        %521 = vmatmul.f32.gmra.mxu0 %v494
        %v522 = vpop.f32.mrf.mxu0
        %v523 = vadd.f32 %v485, %v522
        %524 = vmatmul.f32.gmra.mxu0 %v497
        %v525 = vpop.f32.mrf.mxu0
        %v526 = vadd.f32 %v487, %v525
        %527 = vmatmul.f32.gmra.mxu0 %v500
        %v528 = vpop.f32.mrf.mxu0
        %v529 = vadd.f32 %v489, %v528
        %530 = vmatmul.f32.gmra.mxu0 %v503
        %v531 = vpop.f32.mrf.mxu0
        %v532 = vadd.f32 %v491, %v531
        %533 = vdwg.mxu0
        %534 = vmatpush.msra.mxu0 0.0
        %535 = vmatpush.msra.mxu0 0.0
        %536 = vmatpush.msra.mxu0 0.0
        %537 = vmatpush.msra.mxu0 0.0
        %538 = vmatpush.msra.mxu0 0.0
        %539 = vmatpush.msra.mxu0 0.0
        %540 = vmatpush.msra.mxu0 0.0
        %541 = vmatpush.msra.mxu0 0.0
        %542 = vmatpush.msra.mxu0 %v484
        %543 = vmatpush.msra.mxu0 %v482
        %544 = vmatpush.msra.mxu0 %v480
        %545 = vmatpush.msra.mxu0 %v478
        %546 = vmatpush.msra.mxu0 %v476
        %547 = vmatpush.msra.mxu0 %v474
        %548 = vmatpush.msra.mxu0 %v472
        %549 = vmatpush.msra.mxu0 %v470
        %550 = vmatmul.f32.gmra.mxu0 %v494
        %v551 = vpop.f32.mrf.mxu0
        %v552 = vadd.f32 %v486, %v551
        %553 = vmatmul.f32.gmra.mxu0 %v497
        %v554 = vpop.f32.mrf.mxu0
        %v555 = vadd.f32 %v488, %v554
        %556 = vmatmul.f32.gmra.mxu0 %v500
        %v557 = vpop.f32.mrf.mxu0
        %v558 = vadd.f32 %v490, %v557
        %559 = vmatmul.f32.gmra.mxu0 %v503
        %v560 = vpop.f32.mrf.mxu0
        %v561 = vadd.f32 %v492, %v560
        %562 = vdwg.mxu0
        %563 = vst [vmem:[%s355] sm:$0xff] %v523
        %564 = vst [vmem:[%s355 + $0x8] sm:$0xff] %v552
        %565 = vst [vmem:[%s355 + $0x10] sm:$0xff] %v526
        %566 = vst [vmem:[%s355 + $0x18] sm:$0xff] %v555
        %567 = vst [vmem:[%s355 + $0x20] sm:$0xff] %v529
        %568 = vst [vmem:[%s355 + $0x28] sm:$0xff] %v558
        %569 = vst [vmem:[%s355 + $0x30] sm:$0xff] %v532
        %570 = vst [vmem:[%s355 + $0x38] sm:$0xff] %v561
        %s571 = sand.u32 %s191, 1
        %s572 = scalar_lea.sflag [#allocation4], %s571
        %s573 = sand.u32 %s191, 1
        %s574 = smul.addr %s573, 64
        %s575 = scalar_lea.vmem [#allocation8], %s574
        // Predicated region
        $region57: #{tpu_custom_call.1} parent=43 // pred_check
          %p576 = pneg %p201
        $region58: #{tpu_custom_call.1} parent=43 // pred_check_branch
          %578 = sbr.rel (%p576) target = $region60
        $region59: #{tpu_custom_call.1} parent=43 // pred_region
          %s579 = smul.u32 2, %s31
          %581 = vsyncadd %s572, 0
          %s582 = smul.addr %s30, 8
          %s583 = sadd.s32 %s579, %s582
          %s584 = smul.addr %s583, 8
          %s585 = scalar_lea.hbm %s6, %s584
          %s586 = sshll.u32 %s575, 4
          %s587 = int_to_ptr.vmem [resolvable:$true] %s586
          %s588 = sshll.u32 %s585, 4
          %s589 = int_to_ptr.hbm [resolvable:$true] %s588
          %594 = dma.vmem_to_hbm [thread:$0]  %s587, 1024, %s589, %s572, 256, 256, 16
        $region60: #{tpu_custom_call.1} parent=43 // pred_fallthru
          _
      $region44: #{tpu_custom_call.1} parent=5 // pred_fallthru
        _
      %p595 = scmp.le.s32.totalorder 2, %s21
      // Predicated region
      $region61: #{tpu_custom_call.1} parent=5 // pred_check
        %p596 = pneg %p595
      $region62: #{tpu_custom_call.1} parent=5 // pred_check_branch
        %598 = sbr.rel (%p596) target = $region64
      $region63: #{tpu_custom_call.1} parent=5 // pred_region
        %s599 = ssub.s32 %s21, 2
        // Predicated region
        $region65: #{tpu_custom_call.1} parent=63 // pred_check
          %p600 = pneg %p207
        $region66: #{tpu_custom_call.1} parent=63 // pred_check_branch
          %602 = sbr.rel (%p600) target = $region68
        $region67: #{tpu_custom_call.1} parent=63 // pred_region
          %s603 = sand.u32 %s192, 1
          %s604 = scalar_lea.sflag [#allocation4], %s603
          %s605 = sand.u32 %s192, 1
          %s606 = smul.addr %s605, 64
          %s607 = scalar_lea.vmem [#allocation8], %s606
          %609 = dma.done %s604, 1024
        $region68: #{tpu_custom_call.1} parent=63 // pred_fallthru
          _
      $region64: #{tpu_custom_call.1} parent=5 // pred_fallthru
        _
    $region6: #{tpu_custom_call.1} parent=1 // loop_footer
      %s25 = sadd.s32 1, %s21
    $region7: #{tpu_custom_call.1} parent=1 // loop_footer_branch
      %20 = sbr.rel target = $region3
    $region8: #{tpu_custom_call.1} parent=1 // loop_exit
      _
    %610 = vsyncpa [#allocation3], 1
    %s611 = scalar_lea.sflag [#allocation3], 1
    %612 = vsyncpa %s611, 1
    %613 = vsyncpa [#allocation6], 1
    %s614 = scalar_lea.sflag [#allocation6], 1
    %615 = vsyncpa %s614, 1
    %616 = vsyncpa [#allocation4], 1
    %s617 = scalar_lea.sflag [#allocation4], 1
    %618 = vsyncpa %s617, 1

</llo_original>
